<compile_context>
chip_gen: v7x
topology: tpu7x:2x2x1
jax: 0.10.0
libtpu: 0.0.40
codegen_flags: <defaults>
</compile_context>

<pallas_src>
import jax
import jax.numpy as jnp
from jax.experimental import pallas as pl
from jax.experimental.pallas import tpu as pltpu

_TILE_BYTES = 4 << 20            # ~4 MiB per tile (review: v6e / v7x sweet spot)
_SINGLE_BLOCK_BYTES = 2 << 20    # small/ragged tensors: one full-array block
_VMEM_LIMIT_BYTES = 28 << 20     # 4 MiB tile * (in+out) * double-buffer + slack
                                 # (< v7x 64 MiB physical, raises v5e's 16 MiB default)


def _copy_kernel(x_ref, o_ref):
    # Pure pass-through on one VMEM tile.
    o_ref[...] = x_ref[...]


def _min_sublane(dtype) -> int:
    itemsize = jnp.dtype(dtype).itemsize
    try:
        return {4: 8, 2: 16, 1: 32}[itemsize]
    except KeyError:
        raise ValueError(f"unsupported dtype for TPU tiling: {dtype}") from None


def _pallas_identity(x):
    """Identity over an arbitrary-shaped array via a lane-dense Pallas copy."""
    n = x.size
    if n == 0:
        return x
    dtype = x.dtype
    itemsize = jnp.dtype(dtype).itemsize
    sub = _min_sublane(dtype)
    flat = x.reshape(-1)            # contiguous reshape: metadata only, no HBM copy

    # Prefer a lane-dense last dim that divides the flat size exactly.
    lane = next((c for c in (512, 256, 128) if n % c == 0), None)

    sliced = False
    if lane is not None and (n // lane) >= sub:
        # Lane-dense tiled path: no padding, no post-slice.
        rows = n // lane
        br = max(sub, (_TILE_BYTES // (lane * itemsize)) // sub * sub)
        br = min(br, rows)                       # single full-height block if small
        grid = pl.cdiv(rows, br)                 # ragged last block is masked
        x2d = flat.reshape(rows, lane)
    elif n * itemsize <= _SINGLE_BLOCK_BYTES:
        # Small / ragged: one full-array block (full dims bypass the (8,128) rule),
        # grid=(1,), no pad, no post-slice.
        rows, lane, br, grid = 1, n, 1, 1
        x2d = flat.reshape(1, n)
    else:
        # TODO(synk): large arrays whose size has no 128-multiple factor fall back
        # to a padded copy (one extra HBM round trip); never hit by this module.
        lane = 512
        rows = pl.cdiv(n, lane)
        br = max(sub, (_TILE_BYTES // (lane * itemsize)) // sub * sub)
        grid = pl.cdiv(rows, br)
        x2d = jnp.pad(flat, (0, rows * lane - n)).reshape(rows, lane)
        sliced = True

    y2d = pl.pallas_call(
        _copy_kernel,
        out_shape=jax.ShapeDtypeStruct((rows, lane), dtype),
        grid=(grid,),
        in_specs=[pl.BlockSpec((br, lane), lambda i: (i, 0))],
        out_specs=pl.BlockSpec((br, lane), lambda i: (i, 0)),
        cost_estimate=pl.CostEstimate(
            flops=0, transcendentals=0, bytes_accessed=2 * n * itemsize),
        compiler_params=pltpu.CompilerParams(
            dimension_semantics=("parallel",),      # shard blocks on v7x's 2 TCs
            vmem_limit_bytes=_VMEM_LIMIT_BYTES),
    )(x2d)

    y = y2d.reshape(-1)
    if sliced:
        y = y[:n]
    return y.reshape(x.shape)


# One compile per shape/dtype; async dispatch.
_identity = jax.jit(_pallas_identity)


@jax.jit
def _identity_tuple(*xs):
    # Whole-tuple fused dispatch: one jitted call for all tuple elements.
    return tuple(_pallas_identity(x) for x in xs)


class TupleProc:
    """JAX/Pallas equivalent of the PyTorch TupleProc module."""

    def __init__(self, *modules):
        # Matches nn.ModuleList(modules); no parameters of its own.
        self.items = list(modules)

    def forward(self, *input, **kwargs):
        # TODO(synk): the reference forward never applies self.items and has no
        # tensor output; only the print() side effect is semantic.  Per the perf
        # review the data path is short-circuited here (outputs would be
        # discarded); the Pallas identity pass is exercised in __main__.
        print()          # exactly what the reference forward does
        return None      # implicit None return, reproduced explicitly

    __call__ = forward


if __name__ == "__main__":
    key = jax.random.PRNGKey(0)
    k1, k2 = jax.random.split(key)
    # Small NCHW inputs consistent with a tuple-of-tensors forward signature.
    x1 = jax.random.normal(k1, (2, 4, 16, 16), dtype=jnp.float32)
    x2 = jax.random.normal(k2, (2, 4, 16, 16), dtype=jnp.float32)

    proc = TupleProc()              # no sub-modules: forward ignores them anyway
    out = proc(x1, x2)              # prints a blank line, returns None
    assert out is None

    # Fused dispatch: the whole tuple through the Pallas identity in one call.
    y1, y2 = jax.block_until_ready(_identity_tuple(x1, x2))
    assert bool(jnp.array_equal(y1, x1)) and bool(jnp.array_equal(y2, x2))

    # Exercise every wrapper code path:
    #   * lane-dense multi-block grid (exact and ragged last block),
    #   * small / ragged single full-array block,
    #   * bf16 (dtype-aware sublane multiple).
    tests = [
        jax.random.normal(k1, (4096, 512), dtype=jnp.float32),    # grid=2, exact
        jax.random.normal(k2, (2056, 512), dtype=jnp.float32),    # ragged last block
        jax.random.normal(k1, (2, 3, 7, 7), dtype=jnp.float32),   # small ragged
        jax.random.normal(k2, (2, 4, 16, 16), dtype=jnp.bfloat16),
    ]
    for x in tests:
        y = jax.block_until_ready(_identity(x))
        assert y.shape == x.shape and y.dtype == x.dtype
        assert bool(jnp.array_equal(y, x))

    print("KERNEL_OK")
</pallas_src>

<mosaic_0001>
module attributes {stable_mosaic.version = 11 : i64} {
  func.func @_copy_kernel(%arg0: i32, %arg1: memref<1x2048xf32, #tpu.memory_space<vmem>>, %arg2: memref<1x2048xf32, #tpu.memory_space<vmem>>) attributes {dimension_semantics = [#tpu.dimension_semantics<parallel>], iteration_bounds = array<i64: 1>, scalar_prefetch = 0 : i64, scratch_operands = 0 : i64, tpu.core_type = #tpu.core_type<tc>, window_params = [{transform_indices = @transform_0, window_bounds = array<i64: 1, 2048>}, {transform_indices = @transform_1, window_bounds = array<i64: 1, 2048>}]} {
    %c0 = arith.constant 0 : index
    %c0_0 = arith.constant 0 : index
    %0 = vector.load %arg1[%c0, %c0_0] : memref<1x2048xf32, #tpu.memory_space<vmem>>, vector<1x2048xf32>
    %c0_1 = arith.constant 0 : index
    %c0_2 = arith.constant 0 : index
    %1 = vector.load %arg2[%c0_1, %c0_2] : memref<1x2048xf32, #tpu.memory_space<vmem>>, vector<1x2048xf32>
    tpu.vector_store %arg2[%c0_1, %c0_2], %0 {strides = array<i32>} : memref<1x2048xf32, #tpu.memory_space<vmem>>, vector<1x2048xf32>,
    return
  }
  func.func @transform_0(%arg0: i32) -> (i32, i32) {
    %c0_i32 = arith.constant 0 : i32
    %c0_i32_0 = arith.constant 0 : i32
    return %arg0, %c0_i32 : i32, i32
  }
  func.func @transform_1(%arg0: i32) -> (i32, i32) {
    %c0_i32 = arith.constant 0 : i32
    %c0_i32_0 = arith.constant 0 : i32
    return %arg0, %c0_i32 : i32, i32
  }
}

</mosaic_0001>

<llo_original>
// kernel: _identity_tuple.2
$region0: #{_identity_tuple.2}
  #allocation0 [shape = 'u32[]', space=smem, size = 0x4, offset = 0x4, fixed_abs, tag = 'smem constant byte address 0x4 - core index']
  #allocation1 [shape = 'u32[144,128]{1,0:T(1,128)}', space=vmem, size = 0x12000, scoped, tag = 'internal scratch']
  %s0 = inlined_call_operand.vmem [shape: f32[1,2048], index: 0, kind: input, shape index: {}]
  %s1 = inlined_call_operand.vmem [shape: f32[1,2048], index: 1, kind: output, shape index: {}]
  %s2 = sld [smem:[#allocation0]]
  $region14: #{_identity_tuple.2} parent=0
    _
  %s4 = ssub.s32 1, %s2
  %s5 = scalar_select 0, %s4, %s2
  // Predicated region
  $region2: #{_identity_tuple.2} parent=0 // pred_check
    _
  $region3: #{_identity_tuple.2} parent=0 // pred_check_branch
    %7 = sbr.rel (0) target = $region5
  $region4: #{_identity_tuple.2} parent=0 // pred_region
    _
  $region5: #{_identity_tuple.2} parent=0 // pred_fallthru
    _
  %v8 = vld [vmem:[%s0] sm:$0xff]
  %v9 = vld [vmem:[%s0 + $0x8] sm:$0xff]
  %10 = vst [vmem:[%s1] sm:$0xff] %v8
  %11 = vst [vmem:[%s1 + $0x8] sm:$0xff] %v9
  // Predicated region
  $region6: #{_identity_tuple.2} parent=0 // pred_check
    _
  $region7: #{_identity_tuple.2} parent=0 // pred_check_branch
    %13 = sbr.rel (0) target = $region9
  $region8: #{_identity_tuple.2} parent=0 // pred_region
    _
  $region9: #{_identity_tuple.2} parent=0 // pred_fallthru
    _
  // Predicated region
  $region10: #{_identity_tuple.2} parent=0 // pred_check
    _
  $region11: #{_identity_tuple.2} parent=0 // pred_check_branch
    %15 = sbr.rel (0) target = $region13
  $region12: #{_identity_tuple.2} parent=0 // pred_region
    _
  $region13: #{_identity_tuple.2} parent=0 // pred_fallthru
    _

</llo_original>
